<compile_context>
chip_gen: v6e
topology: v6e:2x2x1
jax: 0.10.0
libtpu: 0.0.40
codegen_flags: <defaults>
</compile_context>

<pallas_src>
import math

import jax
import jax.numpy as jnp
from jax.experimental import pallas as pl
from jax.experimental.pallas import tpu as pltpu

_LANE = 128


def _round_up(x, m):
    return ((x + m - 1) // m) * m


def _min_sublane_tile(dtype):
    """Minimum sublane tile for the packed dtype (8 f32 / 16 bf16 / 32 int8)."""
    itemsize = jnp.dtype(dtype).itemsize
    if itemsize >= 4:
        return 8
    if itemsize == 2:
        return 16
    return 32


def _vmem_capacity_bytes():
    """Generation-aware physical VMEM size (64 MiB v7x, 128 MiB v5e/v6e)."""
    try:
        return int(pltpu.get_tpu_info().vmem_capacity_bytes)
    except Exception:
        return 128 * 1024 * 1024


def _resident_spec(block_shape, index_map):
    """BlockSpec for a grid-invariant (resident) block; single-buffered if supported."""
    try:
        return pl.BlockSpec(block_shape, index_map, pipeline_mode=pl.Buffered(1))
    except Exception:
        # Older API without pipeline_mode / Buffered(1): fall back to default buffering.
        return pl.BlockSpec(block_shape, index_map)


def _make_fused_kernel(num_views, f_in_pad):
    """o = concat(x_v) @ W_cat + bias, one MXU matmul with K = V * f_in_pad."""

    def kernel(*refs):
        x_refs = refs[:num_views]              # each [tm, f_in_pad]
        w_ref = refs[num_views]                # [V*f_in_pad, f_out_pad] resident
        b_ref = refs[num_views + 1]            # [1, f_out_pad] f32 resident
        o_ref = refs[num_views + 2]            # [tm, f_out_pad]
        xcat_ref = refs[num_views + 3]         # VMEM scratch [tm, V*f_in_pad]

        for v in range(num_views):             # lane-aligned static-slice copies
            xcat_ref[:, v * f_in_pad:(v + 1) * f_in_pad] = x_refs[v][...]

        acc = jax.lax.dot_general(
            xcat_ref[...], w_ref[...],
            dimension_numbers=(((1,), (0,)), ((), ())),   # NN form: no in-kernel transpose
            preferred_element_type=jnp.float32,
        )
        o_ref[...] = (acc + b_ref[...]).astype(o_ref.dtype)

    return kernel


def _make_splitk_kernel(num_views):
    """o = sum_v x_v @ W_v + bias with pre-transposed W_v (split-K over views)."""

    def kernel(*refs):
        x_refs = refs[:num_views]                  # each [tm, f_in_pad]
        w_refs = refs[num_views:2 * num_views]     # each [f_in_pad, f_out_pad] resident
        b_ref = refs[2 * num_views]                # [1, f_out_pad] f32 resident
        o_ref = refs[2 * num_views + 1]            # [tm, f_out_pad]

        acc = jax.lax.dot_general(
            x_refs[0][...], w_refs[0][...],
            dimension_numbers=(((1,), (0,)), ((), ())),
            preferred_element_type=jnp.float32,
        )
        for v in range(1, num_views):
            acc = acc + jax.lax.dot_general(
                x_refs[v][...], w_refs[v][...],
                dimension_numbers=(((1,), (0,)), ((), ())),
                preferred_element_type=jnp.float32,
            )
        o_ref[...] = (acc + b_ref[...]).astype(o_ref.dtype)

    return kernel


def concat_decoder_forward(x_list, weight, bias, *, interpret=False):
    """Pallas implementation of ConcatDecoder.forward (mode='concat').

    x_list : sequence of V arrays, each [B, feature_dim]
    weight : [feature_dim, feature_dim * V]   (PyTorch nn.Linear layout)
    bias   : [feature_dim]
    returns: (output [B, feature_dim], None)
    """
    x_list = list(x_list)
    num_views = len(x_list)
    if num_views == 0:
        raise ValueError("ConcatDecoder needs at least one input view")
    batch, f = x_list[0].shape
    in_features = f * num_views
    assert weight.shape == (f, in_features), (weight.shape, (f, in_features))
    assert bias.shape == (f,), bias.shape

    in_dtype = x_list[0].dtype
    out_dtype = jnp.result_type(in_dtype, weight.dtype)

    # Lane-dense padding on BOTH the contraction axis (per-view F) and the output axis.
    f_in_pad = _round_up(f, _LANE)
    f_out_pad = _round_up(f, _LANE)

    if f_in_pad != f:
        x_p = [jnp.pad(x, ((0, 0), (0, f_in_pad - f))) for x in x_list]
    else:
        x_p = x_list

    # Pre-transposed, zero-padded per-view weight slices: W_v^T -> [f_in_pad, f_out_pad].
    w_views = []
    for v in range(num_views):
        w_v = weight[:, v * f:(v + 1) * f].T                     # [f_in, f_out]
        if f_in_pad != f or f_out_pad != f:
            w_v = jnp.pad(w_v, ((0, f_in_pad - f), (0, f_out_pad - f)))
        w_views.append(w_v)

    bias_p = jnp.pad(bias, (0, f_out_pad - f)) if f_out_pad != f else bias
    b2 = bias_p.reshape(1, f_out_pad).astype(jnp.float32)        # cast once, in wrapper

    # Fuse split-K into one matmul when per-view K underfills the MXU depth.
    fuse = num_views > 1 and f_in_pad < 256

    in_bytes = jnp.dtype(in_dtype).itemsize
    w_bytes = jnp.dtype(weight.dtype).itemsize
    out_bytes = jnp.dtype(out_dtype).itemsize

    def vmem_need(tm):
        need = 2 * num_views * tm * f_in_pad * in_bytes       # double-buffered x tiles
        need += 2 * tm * f_out_pad * out_bytes                # double-buffered output
        need += num_views * f_in_pad * f_out_pad * w_bytes    # resident weights (1x)
        need += f_out_pad * 4                                 # resident f32 bias (1x)
        if fuse:
            need += tm * num_views * f_in_pad * in_bytes      # concat scratch
        return need

    min_tile = _min_sublane_tile(in_dtype)
    capacity = _vmem_capacity_bytes()
    budget = min(capacity // 2, 56 * 1024 * 1024)             # ~32 MiB v7x, ~56 MiB v5e/v6e

    tm = 1024
    while tm > min_tile and vmem_need(tm) > budget:
        tm //= 2
    if batch <= tm:
        tm = batch                                            # single full-batch block
        if batch >= 2 * min_tile:
            # Keep both v7x TensorCores busy: at least 2 sublane-aligned grid steps.
            tm = _round_up((batch + 1) // 2, min_tile)
    grid = (pl.cdiv(batch, tm),)

    need = vmem_need(tm)
    vmem_limit = int(min(max(need + 8 * 1024 * 1024, 16 * 1024 * 1024),
                         (capacity * 3) // 5))

    x_specs = [pl.BlockSpec((tm, f_in_pad), lambda i: (i, 0)) for _ in range(num_views)]
    b_spec = _resident_spec((1, f_out_pad), lambda i: (0, 0))
    out_spec = pl.BlockSpec((tm, f_out_pad), lambda i: (i, 0))

    if fuse:
        w_cat = jnp.concatenate(w_views, axis=0)              # [V*f_in_pad, f_out_pad]
        kernel = _make_fused_kernel(num_views, f_in_pad)
        in_specs = x_specs + [
            _resident_spec((num_views * f_in_pad, f_out_pad), lambda i: (0, 0)),
            b_spec,
        ]
        scratch_shapes = [pltpu.VMEM((tm, num_views * f_in_pad), in_dtype)]
        operands = (*x_p, w_cat, b2)
    else:
        kernel = _make_splitk_kernel(num_views)
        w_specs = [_resident_spec((f_in_pad, f_out_pad), lambda i: (0, 0))
                   for _ in range(num_views)]
        in_specs = x_specs + w_specs + [b_spec]
        scratch_shapes = []
        operands = (*x_p, *w_views, b2)

    out_padded = pl.pallas_call(
        kernel,
        out_shape=jax.ShapeDtypeStruct((batch, f_out_pad), out_dtype),
        grid_spec=pltpu.PrefetchScalarGridSpec(
            num_scalar_prefetch=0,
            grid=grid,
            in_specs=in_specs,
            out_specs=out_spec,
            scratch_shapes=scratch_shapes,
        ),
        compiler_params=pltpu.CompilerParams(
            dimension_semantics=("parallel",),
            vmem_limit_bytes=vmem_limit,
        ),
        interpret=interpret,
    )(*operands)

    out = out_padded[:, :f] if f_out_pad != f else out_padded
    return out, None


def init_linear_params(key, in_features, out_features, dtype=jnp.float32):
    """PyTorch-style nn.Linear init: kaiming_uniform_(a=sqrt(5)) -> bound = 1/sqrt(fan_in)."""
    k_w, k_b = jax.random.split(key)
    bound_w = 1.0 / math.sqrt(in_features)
    weight = jax.random.uniform(
        k_w, (out_features, in_features), dtype, minval=-bound_w, maxval=bound_w
    )
    bound_b = 1.0 / math.sqrt(in_features)
    bias = jax.random.uniform(
        k_b, (out_features,), dtype, minval=-bound_b, maxval=bound_b
    )
    return weight, bias


if __name__ == "__main__":
    key = jax.random.PRNGKey(0)

    batch = 8
    feature_dim = 32
    num_views = 3

    k_params, *k_views = jax.random.split(key, 1 + num_views)

    # num_views input views, each [batch, feature_dim]
    x_list = [
        jax.random.normal(k, (batch, feature_dim), dtype=jnp.float32)
        for k in k_views
    ]

    # nn.Linear(feature_dim * num_views, feature_dim)
    weight, bias = init_linear_params(k_params, feature_dim * num_views, feature_dim)

    out, aux = concat_decoder_forward(x_list, weight, bias)
    out = jax.block_until_ready(out)

    # Plain-JAX reference (matches PyTorch: concat -> x @ W.T + b).
    fused_ref = jnp.concatenate(x_list, axis=-1)
    ref = jnp.dot(fused_ref, weight.T, precision=jax.lax.Precision.HIGHEST) + bias

    assert out.shape == (batch, feature_dim)
    assert aux is None
    err = float(jnp.abs(out - ref).max())
    assert jnp.allclose(out, ref, atol=2e-3, rtol=2e-3), err

    print("KERNEL_OK")
</pallas_src>

<mosaic_0001>
module attributes {stable_mosaic.version = 11 : i64} {
  func.func @kernel(%arg0: i32, %arg1: memref<8x128xf32, #tpu.memory_space<vmem>>, %arg2: memref<8x128xf32, #tpu.memory_space<vmem>>, %arg3: memref<8x128xf32, #tpu.memory_space<vmem>>, %arg4: memref<384x128xf32, #tpu.memory_space<vmem>>, %arg5: memref<1x128xf32, #tpu.memory_space<vmem>>, %arg6: memref<8x128xf32, #tpu.memory_space<vmem>>, %arg7: memref<8x384xf32, #tpu.memory_space<vmem>>) attributes {dimension_semantics = [#tpu.dimension_semantics<parallel>], iteration_bounds = array<i64: 1>, scalar_prefetch = 0 : i64, scratch_operands = 1 : i64, tpu.core_type = #tpu.core_type<tc>, window_params = [{transform_indices = @transform_0, window_bounds = array<i64: 8, 128>}, {transform_indices = @transform_1, window_bounds = array<i64: 8, 128>}, {transform_indices = @transform_2, window_bounds = array<i64: 8, 128>}, {pipeline_mode = #tpu.pipeline_mode<synchronous>, transform_indices = @transform_3, window_bounds = array<i64: 384, 128>}, {pipeline_mode = #tpu.pipeline_mode<synchronous>, transform_indices = @transform_4, window_bounds = array<i64: 1, 128>}, {transform_indices = @transform_5, window_bounds = array<i64: 8, 128>}]} {
    %c0 = arith.constant 0 : index
    %c0_0 = arith.constant 0 : index
    %0 = vector.load %arg1[%c0, %c0_0] : memref<8x128xf32, #tpu.memory_space<vmem>>, vector<8x128xf32>
    %c0_1 = arith.constant 0 : index
    %c0_2 = arith.constant 0 : index
    %1 = vector.load %arg7[%c0_1, %c0_2] : memref<8x384xf32, #tpu.memory_space<vmem>>, vector<8x128xf32>
    tpu.vector_store %arg7[%c0_1, %c0_2], %0 {strides = array<i32>} : memref<8x384xf32, #tpu.memory_space<vmem>>, vector<8x128xf32>,
    %c0_3 = arith.constant 0 : index
    %c0_4 = arith.constant 0 : index
    %2 = vector.load %arg2[%c0_3, %c0_4] : memref<8x128xf32, #tpu.memory_space<vmem>>, vector<8x128xf32>
    %c0_5 = arith.constant 0 : index
    %c128 = arith.constant 128 : index
    %3 = vector.load %arg7[%c0_5, %c128] : memref<8x384xf32, #tpu.memory_space<vmem>>, vector<8x128xf32>
    tpu.vector_store %arg7[%c0_5, %c128], %2 {strides = array<i32>} : memref<8x384xf32, #tpu.memory_space<vmem>>, vector<8x128xf32>,
    %c0_6 = arith.constant 0 : index
    %c0_7 = arith.constant 0 : index
    %4 = vector.load %arg3[%c0_6, %c0_7] : memref<8x128xf32, #tpu.memory_space<vmem>>, vector<8x128xf32>
    %c0_8 = arith.constant 0 : index
    %c256 = arith.constant 256 : index
    %5 = vector.load %arg7[%c0_8, %c256] : memref<8x384xf32, #tpu.memory_space<vmem>>, vector<8x128xf32>
    tpu.vector_store %arg7[%c0_8, %c256], %4 {strides = array<i32>} : memref<8x384xf32, #tpu.memory_space<vmem>>, vector<8x128xf32>,
    %c0_9 = arith.constant 0 : index
    %c0_10 = arith.constant 0 : index
    %6 = vector.load %arg7[%c0_9, %c0_10] : memref<8x384xf32, #tpu.memory_space<vmem>>, vector<8x384xf32>
    %c0_11 = arith.constant 0 : index
    %c0_12 = arith.constant 0 : index
    %7 = vector.load %arg4[%c0_11, %c0_12] : memref<384x128xf32, #tpu.memory_space<vmem>>, vector<384x128xf32>
    %cst = arith.constant dense<0.000000e+00> : vector<8x128xf32>
    %8 = tpu.matmul %6, %7, %cst {dimension_numbers = #tpu.dot_dimension_numbers<[1], [0], [0], [1], [0, 0, 1, 1], [], []>} : vector<8x384xf32>, vector<384x128xf32>, vector<8x128xf32> -> vector<8x128xf32>
    %c0_13 = arith.constant 0 : index
    %c0_14 = arith.constant 0 : index
    %9 = vector.load %arg5[%c0_13, %c0_14] : memref<1x128xf32, #tpu.memory_space<vmem>>, vector<1x128xf32>
    %10 = vector.broadcast %9 : vector<1x128xf32> to vector<8x128xf32>
    %11 = arith.addf %8, %10 : vector<8x128xf32>
    %c0_15 = arith.constant 0 : index
    %c0_16 = arith.constant 0 : index
    %12 = vector.load %arg6[%c0_15, %c0_16] : memref<8x128xf32, #tpu.memory_space<vmem>>, vector<8x128xf32>
    tpu.vector_store %arg6[%c0_15, %c0_16], %11 {strides = array<i32>} : memref<8x128xf32, #tpu.memory_space<vmem>>, vector<8x128xf32>,
    return
  }
  func.func @transform_0(%arg0: i32) -> (i32, i32) {
    %c0_i32 = arith.constant 0 : i32
    %c0_i32_0 = arith.constant 0 : i32
    return %arg0, %c0_i32 : i32, i32
  }
  func.func @transform_1(%arg0: i32) -> (i32, i32) {
    %c0_i32 = arith.constant 0 : i32
    %c0_i32_0 = arith.constant 0 : i32
    return %arg0, %c0_i32 : i32, i32
  }
  func.func @transform_2(%arg0: i32) -> (i32, i32) {
    %c0_i32 = arith.constant 0 : i32
    %c0_i32_0 = arith.constant 0 : i32
    return %arg0, %c0_i32 : i32, i32
  }
  func.func @transform_3(%arg0: i32) -> (i32, i32) {
    %c0_i32 = arith.constant 0 : i32
    %c0_i32_0 = arith.constant 0 : i32
    %c0_i32_1 = arith.constant 0 : i32
    return %c0_i32, %c0_i32_0 : i32, i32
  }
  func.func @transform_4(%arg0: i32) -> (i32, i32) {
    %c0_i32 = arith.constant 0 : i32
    %c0_i32_0 = arith.constant 0 : i32
    %c0_i32_1 = arith.constant 0 : i32
    return %c0_i32, %c0_i32_0 : i32, i32
  }
  func.func @transform_5(%arg0: i32) -> (i32, i32) {
    %c0_i32 = arith.constant 0 : i32
    %c0_i32_0 = arith.constant 0 : i32
    return %arg0, %c0_i32 : i32, i32
  }
}

</mosaic_0001>

<llo_original>
// kernel: tpu_custom_call.1
$region0: #{tpu_custom_call.1}
  #allocation0 [shape = 'u32[]', space=smem, size = 0x4, offset = 0x4, fixed_abs, tag = 'smem constant byte address 0x4 - core index']
  #allocation1 [shape = 'u32[144,128]{1,0:T(1,128)}', space=vmem, size = 0x12000, scoped, tag = 'internal scratch']
  #allocation2 [shape = 'f32[8,384]{1,0:T(8,128)}', space=vmem, size = 0x3000, scoped, tag = 'scratch operand']
  %s0 = inlined_call_operand.hbm [shape: f32[8,128], index: 0, kind: input, shape index: {}]
  %s1 = inlined_call_operand.hbm [shape: f32[8,128], index: 1, kind: input, shape index: {}]
  %s2 = inlined_call_operand.hbm [shape: f32[8,128], index: 2, kind: input, shape index: {}]
  %s3 = inlined_call_operand.hbm [shape: f32[384,128], index: 3, kind: input, shape index: {}]
  %s4 = inlined_call_operand.vmem [shape: f32[1,128], index: 4, kind: input, shape index: {}]
  %s5 = inlined_call_operand.hbm [shape: f32[8,128], index: 5, kind: output, shape index: {}]
  %s6 = sld [smem:[#allocation0]]
  $region46: #{tpu_custom_call.1} parent=0
    _
  %s8 = ssub.s32 1, %s6
  %s9 = scalar_select 0, %s8, %s6
  $region1: #{tpu_custom_call.1} parent=0
    #allocation3 [shape = 'u8[4096]{0}', space=vmem, size = 0x1000, scoped, tag = 'input window, operand 0, single buffered']
    #allocation4 [shape = 's32[1]{0}', space=sflag, size = 0x4, scoped, tag = 'scoped memory for tpu_custom_call.1']
    #allocation5 [shape = 's32[1]{0}', space=sflag, size = 0x4, scoped, tag = 'scoped memory for tpu_custom_call.1']
    #allocation6 [shape = 'u8[4096]{0}', space=vmem, size = 0x1000, scoped, tag = 'input window, operand 1, single buffered']
    #allocation7 [shape = 's32[1]{0}', space=sflag, size = 0x4, scoped, tag = 'scoped memory for tpu_custom_call.1']
    #allocation8 [shape = 'u8[4096]{0}', space=vmem, size = 0x1000, scoped, tag = 'input window, operand 2, single buffered']
    #allocation9 [shape = 'u8[196608]{0}', space=vmem, size = 0x30000, scoped, tag = 'input window, operand 3, single buffered']
    #allocation10 [shape = 's32[1]{0}', space=sflag, size = 0x4, scoped, tag = 'scoped memory for tpu_custom_call.1']
    #allocation11 [shape = 'u8[4096]{0}', space=vmem, size = 0x1000, scoped, tag = 'output window, operand 0, single buffered']
    %10 = vsyncpa [#allocation4], 0
    %11 = vsyncpa [#allocation7], 0
    %12 = vsyncpa [#allocation10], 0
    %13 = vsyncpa [#allocation5], 0
    // Predicated region
    $region2: #{tpu_custom_call.1} parent=1 // pred_check
      _
    $region3: #{tpu_custom_call.1} parent=1 // pred_check_branch
      %15 = sbr.rel (0) target = $region5
    $region4: #{tpu_custom_call.1} parent=1 // pred_region
      %s17 = ssub.s32 128, 128
      %18 = vsyncadd [#allocation4], %s17
      %s20 = sshll.u32 [#allocation3], 4
      %s21 = int_to_ptr.vmem [resolvable:$true] %s20
      %23 = dma.hbm_to_vmem [thread:$0]  %s0, 128, %s21, [#allocation4]
    $region5: #{tpu_custom_call.1} parent=1 // pred_fallthru
      _
    // Predicated region
    $region6: #{tpu_custom_call.1} parent=1 // pred_check
      _
    $region7: #{tpu_custom_call.1} parent=1 // pred_check_branch
      %25 = sbr.rel (0) target = $region9
    $region8: #{tpu_custom_call.1} parent=1 // pred_region
      %s27 = ssub.s32 128, 128
      %28 = vsyncadd [#allocation7], %s27
      %s30 = sshll.u32 [#allocation6], 4
      %s31 = int_to_ptr.vmem [resolvable:$true] %s30
      %33 = dma.hbm_to_vmem [thread:$0]  %s1, 128, %s31, [#allocation7]
    $region9: #{tpu_custom_call.1} parent=1 // pred_fallthru
      _
    // Predicated region
    $region10: #{tpu_custom_call.1} parent=1 // pred_check
      _
    $region11: #{tpu_custom_call.1} parent=1 // pred_check_branch
      %35 = sbr.rel (0) target = $region13
    $region12: #{tpu_custom_call.1} parent=1 // pred_region
      %s37 = ssub.s32 128, 128
      %38 = vsyncadd [#allocation7], %s37
      %s40 = sshll.u32 [#allocation8], 4
      %s41 = int_to_ptr.vmem [resolvable:$true] %s40
      %43 = dma.hbm_to_vmem [thread:$0]  %s2, 128, %s41, [#allocation7]
    $region13: #{tpu_custom_call.1} parent=1 // pred_fallthru
      _
    // Predicated region
    $region14: #{tpu_custom_call.1} parent=1 // pred_check
      _
    $region15: #{tpu_custom_call.1} parent=1 // pred_check_branch
      %45 = sbr.rel (0) target = $region17
    $region16: #{tpu_custom_call.1} parent=1 // pred_region
      %s47 = ssub.s32 6144, 6144
      %48 = vsyncadd [#allocation10], %s47
      %s49 = sshll.u32 [#allocation9], 4
      %s50 = int_to_ptr.vmem [resolvable:$true] %s49
      %55 = dma.hbm_to_vmem [thread:$0]  %s3, 6144, %s50, [#allocation10], 128, 128, 8
    $region17: #{tpu_custom_call.1} parent=1 // pred_fallthru
      _
    // Predicated region
    $region18: #{tpu_custom_call.1} parent=1 // pred_check
      _
    $region19: #{tpu_custom_call.1} parent=1 // pred_check_branch
      %57 = sbr.rel (0) target = $region21
    $region20: #{tpu_custom_call.1} parent=1 // pred_region
      _
    $region21: #{tpu_custom_call.1} parent=1 // pred_fallthru
      _
    // Predicated region
    $region22: #{tpu_custom_call.1} parent=1 // pred_check
      _
    $region23: #{tpu_custom_call.1} parent=1 // pred_check_branch
      %59 = sbr.rel (0) target = $region25
    $region24: #{tpu_custom_call.1} parent=1 // pred_region
      %60 = dma.done [#allocation4], 128
    $region25: #{tpu_custom_call.1} parent=1 // pred_fallthru
      _
    // Predicated region
    $region26: #{tpu_custom_call.1} parent=1 // pred_check
      _
    $region27: #{tpu_custom_call.1} parent=1 // pred_check_branch
      %62 = sbr.rel (0) target = $region29
    $region28: #{tpu_custom_call.1} parent=1 // pred_region
      %63 = dma.done [#allocation7], 128
    $region29: #{tpu_custom_call.1} parent=1 // pred_fallthru
      _
    // Predicated region
    $region30: #{tpu_custom_call.1} parent=1 // pred_check
      _
    $region31: #{tpu_custom_call.1} parent=1 // pred_check_branch
      %65 = sbr.rel (0) target = $region33
    $region32: #{tpu_custom_call.1} parent=1 // pred_region
      %66 = dma.done [#allocation7], 128
    $region33: #{tpu_custom_call.1} parent=1 // pred_fallthru
      _
    // Predicated region
    $region34: #{tpu_custom_call.1} parent=1 // pred_check
      _
    $region35: #{tpu_custom_call.1} parent=1 // pred_check_branch
      %68 = sbr.rel (0) target = $region37
    $region36: #{tpu_custom_call.1} parent=1 // pred_region
      %69 = dma.done [#allocation10], 6144
    $region37: #{tpu_custom_call.1} parent=1 // pred_fallthru
      _
    %v70 = vld [vmem:[#allocation3] sm:$0xff]
    %71 = vst [vmem:[#allocation2] sm:$0xff] %v70
    %v72 = vld [vmem:[#allocation6] sm:$0xff]
    %73 = vst [vmem:[#allocation2 + $0x8] sm:$0xff] %v72
    %v74 = vld [vmem:[#allocation8] sm:$0xff]
    %75 = vst [vmem:[#allocation2 + $0x10] sm:$0xff] %v74
    %v76 = vld [vmem:[#allocation2] sm:$0xff]
    %v77 = vld [vmem:[#allocation2 + $0x8] sm:$0xff]
    %v78 = vld [vmem:[#allocation2 + $0x10] sm:$0xff]
    %v79 = vld [vmem:[#allocation9] sm:$0xff]
    %v80 = vld [vmem:[#allocation9 + $0x8] sm:$0xff]
    %v81 = vld [vmem:[#allocation9 + $0x10] sm:$0xff]
    %v82 = vld [vmem:[#allocation9 + $0x18] sm:$0xff]
    %v83 = vld [vmem:[#allocation9 + $0x20] sm:$0xff]
    %v84 = vld [vmem:[#allocation9 + $0x28] sm:$0xff]
    %v85 = vld [vmem:[#allocation9 + $0x30] sm:$0xff]
    %v86 = vld [vmem:[#allocation9 + $0x38] sm:$0xff]
    %v87 = vld [vmem:[#allocation9 + $0x40] sm:$0xff]
    %v88 = vld [vmem:[#allocation9 + $0x48] sm:$0xff]
    %v89 = vld [vmem:[#allocation9 + $0x50] sm:$0xff]
    %v90 = vld [vmem:[#allocation9 + $0x58] sm:$0xff]
    %v91 = vld [vmem:[#allocation9 + $0x60] sm:$0xff]
    %v92 = vld [vmem:[#allocation9 + $0x68] sm:$0xff]
    %v93 = vld [vmem:[#allocation9 + $0x70] sm:$0xff]
    %v94 = vld [vmem:[#allocation9 + $0x78] sm:$0xff]
    %v95 = vld [vmem:[#allocation9 + $0x80] sm:$0xff]
    %v96 = vld [vmem:[#allocation9 + $0x88] sm:$0xff]
    %v97 = vld [vmem:[#allocation9 + $0x90] sm:$0xff]
    %v98 = vld [vmem:[#allocation9 + $0x98] sm:$0xff]
    %v99 = vld [vmem:[#allocation9 + $0xa0] sm:$0xff]
    %v100 = vld [vmem:[#allocation9 + $0xa8] sm:$0xff]
    %v101 = vld [vmem:[#allocation9 + $0xb0] sm:$0xff]
    %v102 = vld [vmem:[#allocation9 + $0xb8] sm:$0xff]
    %v103 = vld [vmem:[#allocation9 + $0xc0] sm:$0xff]
    %v104 = vld [vmem:[#allocation9 + $0xc8] sm:$0xff]
    %v105 = vld [vmem:[#allocation9 + $0xd0] sm:$0xff]
    %v106 = vld [vmem:[#allocation9 + $0xd8] sm:$0xff]
    %v107 = vld [vmem:[#allocation9 + $0xe0] sm:$0xff]
    %v108 = vld [vmem:[#allocation9 + $0xe8] sm:$0xff]
    %v109 = vld [vmem:[#allocation9 + $0xf0] sm:$0xff]
    %v110 = vld [vmem:[#allocation9 + $0xf8] sm:$0xff]
    %v111 = vld [vmem:[#allocation9 + $0x100] sm:$0xff]
    %v112 = vld [vmem:[#allocation9 + $0x108] sm:$0xff]
    %v113 = vld [vmem:[#allocation9 + $0x110] sm:$0xff]
    %v114 = vld [vmem:[#allocation9 + $0x118] sm:$0xff]
    %v115 = vld [vmem:[#allocation9 + $0x120] sm:$0xff]
    %v116 = vld [vmem:[#allocation9 + $0x128] sm:$0xff]
    %v117 = vld [vmem:[#allocation9 + $0x130] sm:$0xff]
    %v118 = vld [vmem:[#allocation9 + $0x138] sm:$0xff]
    %v119 = vld [vmem:[#allocation9 + $0x140] sm:$0xff]
    %v120 = vld [vmem:[#allocation9 + $0x148] sm:$0xff]
    %v121 = vld [vmem:[#allocation9 + $0x150] sm:$0xff]
    %v122 = vld [vmem:[#allocation9 + $0x158] sm:$0xff]
    %v123 = vld [vmem:[#allocation9 + $0x160] sm:$0xff]
    %v124 = vld [vmem:[#allocation9 + $0x168] sm:$0xff]
    %v125 = vld [vmem:[#allocation9 + $0x170] sm:$0xff]
    %v126 = vld [vmem:[#allocation9 + $0x178] sm:$0xff]
    %v127 = vld [vmem:[%s4] sm:$0x1]
    %v129 = vlaneseq
    %v130 = vshrl.u32 %v129, 7
    %v131 = vsub.s32 0, %v130
    %v132 = vrot.slane %v127, %v131
    %134 = vmatprep.subr.mxu0 0.0
    %135 = vmatpush1.msra.mxu0 %v94
    %136 = vmatprep.subr.mxu0 0.0
    %137 = vmatpush1.msra.mxu0 %v93
    %138 = vmatprep.subr.mxu0 0.0
    %139 = vmatpush1.msra.mxu0 %v92
    %140 = vmatprep.subr.mxu0 0.0
    %141 = vmatpush1.msra.mxu0 %v91
    %142 = vmatprep.subr.mxu0 0.0
    %143 = vmatpush1.msra.mxu0 %v90
    %144 = vmatprep.subr.mxu0 0.0
    %145 = vmatpush1.msra.mxu0 %v89
    %146 = vmatprep.subr.mxu0 0.0
    %147 = vmatpush1.msra.mxu0 %v88
    %148 = vmatprep.subr.mxu0 0.0
    %149 = vmatpush1.msra.mxu0 %v87
    %150 = vmatprep.subr.mxu0 0.0
    %151 = vmatpush1.msra.mxu0 %v86
    %152 = vmatprep.subr.mxu0 0.0
    %153 = vmatpush1.msra.mxu0 %v85
    %154 = vmatprep.subr.mxu0 0.0
    %155 = vmatpush1.msra.mxu0 %v84
    %156 = vmatprep.subr.mxu0 0.0
    %157 = vmatpush1.msra.mxu0 %v83
    %158 = vmatprep.subr.mxu0 0.0
    %159 = vmatpush1.msra.mxu0 %v82
    %160 = vmatprep.subr.mxu0 0.0
    %161 = vmatpush1.msra.mxu0 %v81
    %162 = vmatprep.subr.mxu0 0.0
    %163 = vmatpush1.msra.mxu0 %v80
    %164 = vmatprep.subr.mxu0 0.0
    %165 = vmatpush1.msra.mxu0 %v79
    %166 = vmatprep.subr.mxu0 0.0
    %167 = vmatpush2.msra.mxu0 %v110
    %168 = vmatprep.subr.mxu0 0.0
    %169 = vmatpush2.msra.mxu0 %v109
    %170 = vmatprep.subr.mxu0 0.0
    %171 = vmatpush2.msra.mxu0 %v108
    %172 = vmatprep.subr.mxu0 0.0
    %173 = vmatpush2.msra.mxu0 %v107
    %174 = vmatprep.subr.mxu0 0.0
    %175 = vmatpush2.msra.mxu0 %v106
    %176 = vmatprep.subr.mxu0 0.0
    %177 = vmatpush2.msra.mxu0 %v105
    %178 = vmatprep.subr.mxu0 0.0
    %179 = vmatpush2.msra.mxu0 %v104
    %180 = vmatprep.subr.mxu0 0.0
    %181 = vmatpush2.msra.mxu0 %v103
    %182 = vmatprep.subr.mxu0 0.0
    %183 = vmatpush2.msra.mxu0 %v102
    %184 = vmatprep.subr.mxu0 0.0
    %185 = vmatpush2.msra.mxu0 %v101
    %186 = vmatprep.subr.mxu0 0.0
    %187 = vmatpush2.msra.mxu0 %v100
    %188 = vmatprep.subr.mxu0 0.0
    %189 = vmatpush2.msra.mxu0 %v99
    %190 = vmatprep.subr.mxu0 0.0
    %191 = vmatpush2.msra.mxu0 %v98
    %192 = vmatprep.subr.mxu0 0.0
    %193 = vmatpush2.msra.mxu0 %v97
    %194 = vmatprep.subr.mxu0 0.0
    %195 = vmatpush2.msra.mxu0 %v96
    %196 = vmatprep.subr.mxu0 0.0
    %197 = vmatpush2.msra.mxu0 %v95
    %198 = vmatprep.mubr.f32.mxu0 %v77
    %199 = vmatmul.mubr.f32.gmra.mxu0 %v76
    %v200 = vpop.f32.mrf.mxu0
    %v201 = vadd.f32 %v132, %v200
    %v202 = vpop.f32.mrf.mxu0
    %203 = vdwg.mxu0
    %204 = vmatprep.subr.mxu0 0.0
    %205 = vmatpush1.msra.mxu0 %v126
    %206 = vmatprep.subr.mxu0 0.0
    %207 = vmatpush1.msra.mxu0 %v125
    %208 = vmatprep.subr.mxu0 0.0
    %209 = vmatpush1.msra.mxu0 %v124
    %210 = vmatprep.subr.mxu0 0.0
    %211 = vmatpush1.msra.mxu0 %v123
    %212 = vmatprep.subr.mxu0 0.0
    %213 = vmatpush1.msra.mxu0 %v122
    %214 = vmatprep.subr.mxu0 0.0
    %215 = vmatpush1.msra.mxu0 %v121
    %216 = vmatprep.subr.mxu0 0.0
    %217 = vmatpush1.msra.mxu0 %v120
    %218 = vmatprep.subr.mxu0 0.0
    %219 = vmatpush1.msra.mxu0 %v119
    %220 = vmatprep.subr.mxu0 0.0
    %221 = vmatpush1.msra.mxu0 %v118
    %222 = vmatprep.subr.mxu0 0.0
    %223 = vmatpush1.msra.mxu0 %v117
    %224 = vmatprep.subr.mxu0 0.0
    %225 = vmatpush1.msra.mxu0 %v116
    %226 = vmatprep.subr.mxu0 0.0
    %227 = vmatpush1.msra.mxu0 %v115
    %228 = vmatprep.subr.mxu0 0.0
    %229 = vmatpush1.msra.mxu0 %v114
    %230 = vmatprep.subr.mxu0 0.0
    %231 = vmatpush1.msra.mxu0 %v113
    %232 = vmatprep.subr.mxu0 0.0
    %233 = vmatpush1.msra.mxu0 %v112
    %234 = vmatprep.subr.mxu0 0.0
    %235 = vmatpush1.msra.mxu0 %v111
    %236 = vmatprep.subr.mxu0 0.0
    %237 = vmatpush2.msra.mxu0 0.0
    %238 = vmatprep.subr.mxu0 0.0
    %239 = vmatpush2.msra.mxu0 0.0
    %240 = vmatprep.subr.mxu0 0.0
    %241 = vmatpush2.msra.mxu0 0.0
    %242 = vmatprep.subr.mxu0 0.0
    %243 = vmatpush2.msra.mxu0 0.0
    %244 = vmatprep.subr.mxu0 0.0
    %245 = vmatpush2.msra.mxu0 0.0
    %246 = vmatprep.subr.mxu0 0.0
    %247 = vmatpush2.msra.mxu0 0.0
    %248 = vmatprep.subr.mxu0 0.0
    %249 = vmatpush2.msra.mxu0 0.0
    %250 = vmatprep.subr.mxu0 0.0
    %251 = vmatpush2.msra.mxu0 0.0
    %252 = vmatprep.subr.mxu0 0.0
    %253 = vmatpush2.msra.mxu0 0.0
    %254 = vmatprep.subr.mxu0 0.0
    %255 = vmatpush2.msra.mxu0 0.0
    %256 = vmatprep.subr.mxu0 0.0
    %257 = vmatpush2.msra.mxu0 0.0
    %258 = vmatprep.subr.mxu0 0.0
    %259 = vmatpush2.msra.mxu0 0.0
    %260 = vmatprep.subr.mxu0 0.0
    %261 = vmatpush2.msra.mxu0 0.0
    %262 = vmatprep.subr.mxu0 0.0
    %263 = vmatpush2.msra.mxu0 0.0
    %264 = vmatprep.subr.mxu0 0.0
    %265 = vmatpush2.msra.mxu0 0.0
    %266 = vmatprep.subr.mxu0 0.0
    %267 = vmatpush2.msra.mxu0 0.0
    %268 = vmatprep.mubr.f32.mxu0 0.0
    %269 = vmatmul.mubr.f32.gmra.mxu0 %v78
    %v270 = vpop.f32.mrf.mxu0
    %v271 = vadd.f32 %v201, %v270
    %v272 = vpop.f32.mrf.mxu0
    %273 = vdwg.mxu0
    %274 = vst [vmem:[#allocation11] sm:$0xff] %v271
    // Predicated region
    $region38: #{tpu_custom_call.1} parent=1 // pred_check
      _
    $region39: #{tpu_custom_call.1} parent=1 // pred_check_branch
      %276 = sbr.rel (0) target = $region41
    $region40: #{tpu_custom_call.1} parent=1 // pred_region
      %s278 = ssub.s32 128, 128
      %279 = vsyncadd [#allocation5], %s278
      %s281 = sshll.u32 [#allocation11], 4
      %s282 = int_to_ptr.vmem [resolvable:$true] %s281
      %284 = dma.vmem_to_hbm [thread:$0]  %s282, 128, %s5, [#allocation5]
    $region41: #{tpu_custom_call.1} parent=1 // pred_fallthru
      _
    // Predicated region
    $region42: #{tpu_custom_call.1} parent=1 // pred_check
      _
    $region43: #{tpu_custom_call.1} parent=1 // pred_check_branch
      %286 = sbr.rel (0) target = $region45
    $region44: #{tpu_custom_call.1} parent=1 // pred_region
      %287 = dma.done [#allocation5], 128
    $region45: #{tpu_custom_call.1} parent=1 // pred_fallthru
      _
    %288 = vsyncpa [#allocation4], 1
    %289 = vsyncpa [#allocation7], 1
    %290 = vsyncpa [#allocation10], 1
    %291 = vsyncpa [#allocation5], 1

</llo_original>
